<compile_context>
chip_gen: v6e
topology: v6e:2x2x1
jax: 0.10.0
libtpu: 0.0.40
codegen_flags: <defaults>
</compile_context>

<pallas_src>
import jax
import jax.numpy as jnp
from jax.experimental import pallas as pl
from jax.experimental.pallas import tpu as pltpu

QINT16_MIN, QINT16_MAX = -32768.0, 32767.0
QINT8_MIN, QINT8_MAX = -128.0, 127.0

_LANES = 1024                       # lane-dense layout, always 1024 wide
_TILE_BYTES = 2 * 1024 * 1024       # ~2 MiB row tiles (safe on v5e/v6e/v7x)
_VMEM_LIMIT = 32 * 1024 * 1024      # explicit scoped-VMEM limit


def _observer_kernel(x_ref, y_ref, part_ref):
    """One pass over x,y: per-lane abs-max of 1/y and of x*(1/y)."""
    @pl.when(pl.program_id(0) == 0)
    def _():
        part_ref[...] = jnp.zeros_like(part_ref)

    x = x_ref[...].astype(jnp.float32)
    y = y_ref[...].astype(jnp.float32)
    recip = pl.reciprocal(y, approx=False)                       # exact
    m_r = jnp.max(jnp.abs(recip), axis=0, keepdims=True)         # (1, lanes)
    m_o = jnp.max(jnp.abs(x * recip), axis=0, keepdims=True)     # (1, lanes)
    part_ref[...] = jnp.maximum(part_ref[...],
                                jnp.concatenate([m_r, m_o], axis=0))


def _div_kernel(scales_ref, x_ref, y_ref, o_ref):
    # scales_ref (SMEM, scalar-prefetched): [1/rscale, rscale/oscale, oscale]
    inv_rscale = scales_ref[0]
    fold = scales_ref[1]
    oscale = scales_ref[2]

    x = x_ref[...].astype(jnp.float32)
    y = y_ref[...].astype(jnp.float32)

    # SegmentLUT(torch.reciprocal) hot path + qint16 fake-quant.  Only the
    # integer code is formed; its dequant scale is folded into the next stage.
    # TODO(synk): SegmentLUT's bounded piecewise segments near y==0 are not
    # modeled; an exact reciprocal is used instead.
    recip = pl.reciprocal(y, approx=False)
    q16 = jnp.clip(jnp.round(recip * inv_rscale), QINT16_MIN, QINT16_MAX)

    # FloatFunctional.mul + qconfig (qint8) fake-quant, with the qint16
    # dequant scale folded in:  round(x * q16 * (rscale/oscale)).
    q8 = jnp.clip(jnp.round(x * q16 * fold), QINT8_MIN, QINT8_MAX)
    o_ref[...] = (q8 * oscale).astype(o_ref.dtype)


def _layout(n, bytes_per_elem):
    """Rows/tile_rows for a lane-dense (rows, 1024) layout with ~2 MiB tiles."""
    rows_raw = -(-n // _LANES)
    target_rows = max(8, _TILE_BYTES // (_LANES * bytes_per_elem))
    if rows_raw <= target_rows:
        tile_rows = rows_raw            # single block == full array dims: legal
    else:
        tile_rows = (target_rows // 8) * 8
    rows = -(-rows_raw // tile_rows) * tile_rows   # pad rows to whole tiles
    return rows, tile_rows


@jax.jit
def segment_lut_div(x, y):
    """QAT SegmentLUTDiv.forward(x, y) == fakequant8(x * fakequant16(1/y))."""
    assert x.shape == y.shape, "broadcasting not needed for this module demo"
    orig_shape = x.shape
    out_dtype = x.dtype
    n = x.size

    rows, tile_rows = _layout(n, jnp.dtype(x.dtype).itemsize)
    padded_n = rows * _LANES

    fx = x.reshape(-1)
    fy = y.reshape(-1)
    if padded_n != n:
        # Pad values chosen so they cannot perturb the observer maxima:
        # x pad = 0, y pad = +inf  ->  1/y == 0 and x*(1/y) == 0 in the pad.
        fx = jnp.concatenate([fx, jnp.zeros((padded_n - n,), fx.dtype)])
        fy = jnp.concatenate([fy, jnp.full((padded_n - n,), jnp.inf, fy.dtype)])
    x2 = fx.reshape(rows, _LANES)
    y2 = fy.reshape(rows, _LANES)

    grid = (rows // tile_rows,)

    # ---- pass 1: fused observer (single read of x and y) ----
    obs_tile = pl.BlockSpec((tile_rows, _LANES), lambda i: (i, 0))
    part = pl.pallas_call(
        _observer_kernel,
        out_shape=jax.ShapeDtypeStruct((2, _LANES), jnp.float32),
        grid_spec=pltpu.PrefetchScalarGridSpec(
            num_scalar_prefetch=0,
            grid=grid,
            in_specs=[obs_tile, obs_tile],
            out_specs=pl.BlockSpec((2, _LANES), lambda i: (0, 0)),
        ),
        compiler_params=pltpu.CompilerParams(
            dimension_semantics=("arbitrary",),   # output is an accumulator
            vmem_limit_bytes=_VMEM_LIMIT,
        ),
    )(x2, y2)

    rscale = jnp.maximum(jnp.max(part[0]), 1e-12) / QINT16_MAX
    oscale = jnp.maximum(jnp.max(part[1]), 1e-12) / QINT8_MAX
    scales = jnp.stack([1.0 / rscale, rscale / oscale, oscale]
                       ).astype(jnp.float32)

    # ---- pass 2: elementwise double fake-quant ----
    tile = pl.BlockSpec((tile_rows, _LANES), lambda i, _s: (i, 0))
    out = pl.pallas_call(
        _div_kernel,
        out_shape=jax.ShapeDtypeStruct((rows, _LANES), out_dtype),
        grid_spec=pltpu.PrefetchScalarGridSpec(
            num_scalar_prefetch=1,          # scales -> SMEM, read once
            grid=grid,
            in_specs=[tile, tile],
            out_specs=tile,
        ),
        compiler_params=pltpu.CompilerParams(
            dimension_semantics=("parallel",),  # elementwise: shard across TCs
            vmem_limit_bytes=_VMEM_LIMIT,
        ),
    )(scales, x2, y2)

    return out.reshape(-1)[:n].reshape(orig_shape)


if __name__ == "__main__":
    key = jax.random.PRNGKey(0)
    kx, ky = jax.random.split(key)
    # NCHW inputs: batch=2, channels=4, spatial 16x16.
    x = jax.random.normal(kx, (2, 4, 16, 16), dtype=jnp.float32)
    # keep y away from zero (it is a divisor), like a real use of div
    y = jax.random.uniform(ky, (2, 4, 16, 16), dtype=jnp.float32,
                           minval=0.5, maxval=2.0)

    out = segment_lut_div(x, y)
    jax.block_until_ready(out)

    # pure-JAX reference of the identical fake-quant math (same scale folding
    # and multiplication order as the kernel: fq8(x * fq16(1/y))).
    recip = 1.0 / y
    rscale = jnp.maximum(jnp.max(jnp.abs(recip)), 1e-12) / QINT16_MAX
    oscale = jnp.maximum(jnp.max(jnp.abs(x * recip)), 1e-12) / QINT8_MAX
    q16 = jnp.clip(jnp.round(recip * (1.0 / rscale)), QINT16_MIN, QINT16_MAX)
    q8 = jnp.clip(jnp.round(x * q16 * (rscale / oscale)), QINT8_MIN, QINT8_MAX)
    ref = q8 * oscale
    assert jnp.allclose(out, ref, atol=1e-5, rtol=1e-5)

    print("KERNEL_OK")
</pallas_src>

<mosaic_0001>
module attributes {stable_mosaic.version = 11 : i64} {
  func.func @_observer_kernel(%arg0: i32, %arg1: memref<2x1024xf32, #tpu.memory_space<vmem>>, %arg2: memref<2x1024xf32, #tpu.memory_space<vmem>>, %arg3: memref<2x1024xf32, #tpu.memory_space<vmem>>) attributes {dimension_semantics = [#tpu.dimension_semantics<arbitrary>], iteration_bounds = array<i64: 1>, scalar_prefetch = 0 : i64, scratch_operands = 0 : i64, tpu.core_type = #tpu.core_type<tc>, window_params = [{transform_indices = @transform_0, window_bounds = array<i64: 2, 1024>}, {transform_indices = @transform_1, window_bounds = array<i64: 2, 1024>}, {pipeline_mode = #tpu.pipeline_mode<synchronous>, transform_indices = @transform_2, window_bounds = array<i64: 2, 1024>}]} {
    %c0_i32 = arith.constant 0 : i32
    %0 = arith.cmpi eq, %arg0, %c0_i32 : i32
    %1 = arith.extui %0 : i1 to i32
    %c0_i32_0 = arith.constant 0 : i32
    %2 = arith.cmpi ne, %1, %c0_i32_0 : i32
    scf.if %2 {
      %cst_9 = arith.constant 0.000000e+00 : f32
      %17 = vector.broadcast %cst_9 : f32 to vector<2x1024xf32>
      %c0_10 = arith.constant 0 : index
      %c0_11 = arith.constant 0 : index
      %18 = vector.load %arg3[%c0_10, %c0_11] : memref<2x1024xf32, #tpu.memory_space<vmem>>, vector<2x1024xf32>
      tpu.vector_store %arg3[%c0_10, %c0_11], %17 {strides = array<i32>} : memref<2x1024xf32, #tpu.memory_space<vmem>>, vector<2x1024xf32>,
    } else {
    }
    %c0 = arith.constant 0 : index
    %c0_1 = arith.constant 0 : index
    %3 = vector.load %arg1[%c0, %c0_1] : memref<2x1024xf32, #tpu.memory_space<vmem>>, vector<2x1024xf32>
    %c0_2 = arith.constant 0 : index
    %c0_3 = arith.constant 0 : index
    %4 = vector.load %arg2[%c0_2, %c0_3] : memref<2x1024xf32, #tpu.memory_space<vmem>>, vector<2x1024xf32>
    %5 = tpu.reciprocal %4 : vector<2x1024xf32> -> vector<2x1024xf32>
    %6 = math.absf %5 : vector<2x1024xf32>
    %cst = arith.constant dense<0xFF800000> : vector<1024xf32>
    %7 = vector.multi_reduction <maximumf>, %6, %cst [0] : vector<2x1024xf32> to vector<1024xf32>
    %8 = vector.shape_cast %7 : vector<1024xf32> to vector<1x1024xf32>
    %9 = arith.mulf %3, %5 : vector<2x1024xf32>
    %10 = math.absf %9 : vector<2x1024xf32>
    %cst_4 = arith.constant dense<0xFF800000> : vector<1024xf32>
    %11 = vector.multi_reduction <maximumf>, %10, %cst_4 [0] : vector<2x1024xf32> to vector<1024xf32>
    %12 = vector.shape_cast %11 : vector<1024xf32> to vector<1x1024xf32>
    %c0_5 = arith.constant 0 : index
    %c0_6 = arith.constant 0 : index
    %13 = vector.load %arg3[%c0_5, %c0_6] : memref<2x1024xf32, #tpu.memory_space<vmem>>, vector<2x1024xf32>
    %14 = tpu.concatenate %8, %12 in 0 : vector<1x1024xf32>, vector<1x1024xf32> -> vector<2x1024xf32>
    %15 = arith.maximumf %13, %14 : vector<2x1024xf32>
    %c0_7 = arith.constant 0 : index
    %c0_8 = arith.constant 0 : index
    %16 = vector.load %arg3[%c0_7, %c0_8] : memref<2x1024xf32, #tpu.memory_space<vmem>>, vector<2x1024xf32>
    tpu.vector_store %arg3[%c0_7, %c0_8], %15 {strides = array<i32>} : memref<2x1024xf32, #tpu.memory_space<vmem>>, vector<2x1024xf32>,
    return
  }
  func.func @transform_0(%arg0: i32) -> (i32, i32) {
    %c0_i32 = arith.constant 0 : i32
    %c0_i32_0 = arith.constant 0 : i32
    return %arg0, %c0_i32 : i32, i32
  }
  func.func @transform_1(%arg0: i32) -> (i32, i32) {
    %c0_i32 = arith.constant 0 : i32
    %c0_i32_0 = arith.constant 0 : i32
    return %arg0, %c0_i32 : i32, i32
  }
  func.func @transform_2(%arg0: i32) -> (i32, i32) {
    %c0_i32 = arith.constant 0 : i32
    %c0_i32_0 = arith.constant 0 : i32
    %c0_i32_1 = arith.constant 0 : i32
    return %c0_i32, %c0_i32_0 : i32, i32
  }
}

module attributes {stable_mosaic.version = 11 : i64} {
  func.func @_div_kernel(%arg0: i32, %arg1: memref<3xf32, #tpu.memory_space<smem>>, %arg2: memref<2x1024xf32, #tpu.memory_space<vmem>>, %arg3: memref<2x1024xf32, #tpu.memory_space<vmem>>, %arg4: memref<2x1024xf32, #tpu.memory_space<vmem>>) attributes {dimension_semantics = [#tpu.dimension_semantics<parallel>], iteration_bounds = array<i64: 1>, scalar_prefetch = 1 : i64, scratch_operands = 0 : i64, tpu.core_type = #tpu.core_type<tc>, window_params = [{transform_indices = @transform_0, window_bounds = array<i64: 2, 1024>}, {transform_indices = @transform_1, window_bounds = array<i64: 2, 1024>}, {transform_indices = @transform_2, window_bounds = array<i64: 2, 1024>}]} {
    %c0 = arith.constant 0 : index
    %0 = memref.load %arg1[%c0] : memref<3xf32, #tpu.memory_space<smem>>
    %c1 = arith.constant 1 : index
    %1 = memref.load %arg1[%c1] : memref<3xf32, #tpu.memory_space<smem>>
    %c2 = arith.constant 2 : index
    %2 = memref.load %arg1[%c2] : memref<3xf32, #tpu.memory_space<smem>>
    %c0_0 = arith.constant 0 : index
    %c0_1 = arith.constant 0 : index
    %3 = vector.load %arg2[%c0_0, %c0_1] : memref<2x1024xf32, #tpu.memory_space<vmem>>, vector<2x1024xf32>
    %c0_2 = arith.constant 0 : index
    %c0_3 = arith.constant 0 : index
    %4 = vector.load %arg3[%c0_2, %c0_3] : memref<2x1024xf32, #tpu.memory_space<vmem>>, vector<2x1024xf32>
    %5 = tpu.reciprocal %4 : vector<2x1024xf32> -> vector<2x1024xf32>
    %6 = vector.broadcast %0 : f32 to vector<2x1024xf32>
    %7 = arith.mulf %5, %6 : vector<2x1024xf32>
    %8 = math.roundeven %7 : vector<2x1024xf32>
    %cst = arith.constant -3.276800e+04 : f32
    %cst_4 = arith.constant 3.276700e+04 : f32
    %9 = vector.broadcast %cst : f32 to vector<2x1024xf32>
    %10 = arith.maximumf %9, %8 : vector<2x1024xf32>
    %11 = vector.broadcast %cst_4 : f32 to vector<2x1024xf32>
    %12 = arith.minimumf %11, %10 : vector<2x1024xf32>
    %13 = arith.mulf %3, %12 : vector<2x1024xf32>
    %14 = vector.broadcast %1 : f32 to vector<2x1024xf32>
    %15 = arith.mulf %13, %14 : vector<2x1024xf32>
    %16 = math.roundeven %15 : vector<2x1024xf32>
    %cst_5 = arith.constant -1.280000e+02 : f32
    %cst_6 = arith.constant 1.270000e+02 : f32
    %17 = vector.broadcast %cst_5 : f32 to vector<2x1024xf32>
    %18 = arith.maximumf %17, %16 : vector<2x1024xf32>
    %19 = vector.broadcast %cst_6 : f32 to vector<2x1024xf32>
    %20 = arith.minimumf %19, %18 : vector<2x1024xf32>
    %21 = vector.broadcast %2 : f32 to vector<2x1024xf32>
    %22 = arith.mulf %20, %21 : vector<2x1024xf32>
    %c0_7 = arith.constant 0 : index
    %c0_8 = arith.constant 0 : index
    %23 = vector.load %arg4[%c0_7, %c0_8] : memref<2x1024xf32, #tpu.memory_space<vmem>>, vector<2x1024xf32>
    tpu.vector_store %arg4[%c0_7, %c0_8], %22 {strides = array<i32>} : memref<2x1024xf32, #tpu.memory_space<vmem>>, vector<2x1024xf32>,
    return
  }
  func.func @transform_0(%arg0: i32, %arg1: memref<3xf32, #tpu.memory_space<smem>>) -> (i32, i32) {
    %c0_i32 = arith.constant 0 : i32
    %c0_i32_0 = arith.constant 0 : i32
    return %arg0, %c0_i32 : i32, i32
  }
  func.func @transform_1(%arg0: i32, %arg1: memref<3xf32, #tpu.memory_space<smem>>) -> (i32, i32) {
    %c0_i32 = arith.constant 0 : i32
    %c0_i32_0 = arith.constant 0 : i32
    return %arg0, %c0_i32 : i32, i32
  }
  func.func @transform_2(%arg0: i32, %arg1: memref<3xf32, #tpu.memory_space<smem>>) -> (i32, i32) {
    %c0_i32 = arith.constant 0 : i32
    %c0_i32_0 = arith.constant 0 : i32
    return %arg0, %c0_i32 : i32, i32
  }
}

</mosaic_0001>

<llo_original>
// kernel: segment_lut_div.3
$region0: #{segment_lut_div.3}
  #allocation0 [shape = 'u32[]', space=smem, size = 0x4, offset = 0x4, fixed_abs, tag = 'smem constant byte address 0x4 - core index']
  #allocation1 [shape = 'u32[144,128]{1,0:T(1,128)}', space=vmem, size = 0x12000, scoped, tag = 'internal scratch']
  #allocation2 [shape = 's32[1]{0}', space=sflag, size = 0x4, scoped, tag = 'scoped memory for segment_lut_div.3']
  #allocation3 [shape = 'u8[512]{0}', space=smem, size = 0x200, scoped, tag = 'prefetched SMEM operand 0']
  %s0 = inlined_call_operand.vmem [shape: f32[3], index: 0, kind: input, shape index: {}]
  %s1 = inlined_call_operand.vmem [shape: f32[2,1024], index: 1, kind: input, shape index: {}]
  %s2 = inlined_call_operand.vmem [shape: f32[2,1024], index: 2, kind: input, shape index: {}]
  %s3 = inlined_call_operand.vmem [shape: f32[2,1024], index: 3, kind: output, shape index: {}]
  %s4 = sld [smem:[#allocation0]]
  $region18: #{segment_lut_div.3} parent=0
    _
  %s6 = ssub.s32 1, %s4
  %s7 = scalar_select 0, %s6, %s4
  %s8 = sshll.u32 %s0, 4
  %s9 = int_to_ptr.vmem [resolvable:$true] %s8
  %11 = dma.vmem_to_smem %s9, 16, [#allocation3], [#allocation2]
  %12 = dma.done [#allocation2], 16
  %13 = sfence
  // Predicated region
  $region2: #{segment_lut_div.3} parent=0 // pred_check
    _
  $region3: #{segment_lut_div.3} parent=0 // pred_check_branch
    %15 = sbr.rel (0) target = $region5
  $region4: #{segment_lut_div.3} parent=0 // pred_region
    _
  $region5: #{segment_lut_div.3} parent=0 // pred_fallthru
    _
  // Predicated region
  $region6: #{segment_lut_div.3} parent=0 // pred_check
    _
  $region7: #{segment_lut_div.3} parent=0 // pred_check_branch
    %17 = sbr.rel (0) target = $region9
  $region8: #{segment_lut_div.3} parent=0 // pred_region
    _
  $region9: #{segment_lut_div.3} parent=0 // pred_fallthru
    _
  %s18 = sld [smem:[#allocation3]]
  %s19 = sld [smem:[#allocation3 + $0x1]]
  %s20 = sld [smem:[#allocation3 + $0x2]]
  %v21 = vld [vmem:[%s1] sm:$0xff]
  %v22 = vld [vmem:[%s1 + $0x8] sm:$0xff]
  %v23 = vld [vmem:[%s2] sm:$0xff]
  %v24 = vld [vmem:[%s2 + $0x8] sm:$0xff]
  %v25 = vrcp.pop %v23
  %v26 = vrcp.pop %v24
  %v27 = vstv %s18
  %v28 = vmul.f32 %v25, %v27
  %v29 = vmul.f32 %v26, %v27
  %v30 = vround.ne.pseudo %v28
  %v31 = vround.ne.pseudo %v29
  %v32 = vmax.f32 %v30, -32768.0
  %v33 = vmax.f32 %v31, -32768.0
  %v34 = vmin.f32 %v32, 32767.0
  %v35 = vmin.f32 %v33, 32767.0
  %v36 = vmul.f32 %v21, %v34
  %v37 = vmul.f32 %v22, %v35
  %v38 = vstv %s19
  %v39 = vmul.f32 %v36, %v38
  %v40 = vmul.f32 %v37, %v38
  %v41 = vround.ne.pseudo %v39
  %v42 = vround.ne.pseudo %v40
  %v43 = vmax.f32 %v41, -128.0
  %v44 = vmax.f32 %v42, -128.0
  %v45 = vmin.f32 %v43, 127.0
  %v46 = vmin.f32 %v44, 127.0
  %v47 = vstv %s20
  %v48 = vmul.f32 %v45, %v47
  %v49 = vmul.f32 %v46, %v47
  %50 = vst [vmem:[%s3] sm:$0xff] %v48
  %51 = vst [vmem:[%s3 + $0x8] sm:$0xff] %v49
  // Predicated region
  $region10: #{segment_lut_div.3} parent=0 // pred_check
    _
  $region11: #{segment_lut_div.3} parent=0 // pred_check_branch
    %53 = sbr.rel (0) target = $region13
  $region12: #{segment_lut_div.3} parent=0 // pred_region
    _
  $region13: #{segment_lut_div.3} parent=0 // pred_fallthru
    _
  // Predicated region
  $region14: #{segment_lut_div.3} parent=0 // pred_check
    _
  $region15: #{segment_lut_div.3} parent=0 // pred_check_branch
    %55 = sbr.rel (0) target = $region17
  $region16: #{segment_lut_div.3} parent=0 // pred_region
    _
  $region17: #{segment_lut_div.3} parent=0 // pred_fallthru
    _

// kernel: segment_lut_div.2
$region0: #{segment_lut_div.2}
  #allocation0 [shape = 'u32[]', space=smem, size = 0x4, offset = 0x4, fixed_abs, tag = 'smem constant byte address 0x4 - core index']
  #allocation1 [shape = 'u32[144,128]{1,0:T(1,128)}', space=vmem, size = 0x12000, scoped, tag = 'internal scratch']
  %s0 = inlined_call_operand.vmem [shape: f32[2,1024], index: 0, kind: input, shape index: {}]
  %s1 = inlined_call_operand.vmem [shape: f32[2,1024], index: 1, kind: input, shape index: {}]
  %s2 = inlined_call_operand.vmem [shape: f32[2,1024], index: 2, kind: output, shape index: {}]
  %s3 = sld [smem:[#allocation0]]
  $region22: #{segment_lut_div.2} parent=0
    _
  %s5 = ssub.s32 1, %s3
  %s6 = scalar_select 0, %s5, %s3
  // Predicated region
  $region2: #{segment_lut_div.2} parent=0 // pred_check
    _
  $region3: #{segment_lut_div.2} parent=0 // pred_check_branch
    %8 = sbr.rel (0) target = $region5
  $region4: #{segment_lut_div.2} parent=0 // pred_region
    _
  $region5: #{segment_lut_div.2} parent=0 // pred_fallthru
    _
  // Predicated region
  $region6: #{segment_lut_div.2} parent=0 // pred_check
    _
  $region7: #{segment_lut_div.2} parent=0 // pred_check_branch
    %10 = sbr.rel (0) target = $region9
  $region8: #{segment_lut_div.2} parent=0 // pred_region
    _
  $region9: #{segment_lut_div.2} parent=0 // pred_fallthru
    _
  %p11 = scmp.eq.s32.totalorder 0, 0
  // Predicated region
  $region10: #{segment_lut_div.2} parent=0 // pred_check
    %p12 = pneg %p11
  $region11: #{segment_lut_div.2} parent=0 // pred_check_branch
    %14 = sbr.rel (%p12) target = $region13
  $region12: #{segment_lut_div.2} parent=0 // pred_region
    %15 = vst [vmem:[%s2] sm:$0xff] 0.0
    %16 = vst [vmem:[%s2 + $0x8] sm:$0xff] 0.0
  $region13: #{segment_lut_div.2} parent=0 // pred_fallthru
    _
  %v17 = vld [vmem:[%s0] sm:$0xff]
  %v18 = vld [vmem:[%s0 + $0x8] sm:$0xff]
  %v19 = vld [vmem:[%s1] sm:$0xff]
  %v20 = vld [vmem:[%s1 + $0x8] sm:$0xff]
  %v21 = vrcp.pop %v19
  %v22 = vrcp.pop %v20
  %v23 = vand.u32 2147483647, %v21
  %v24 = vand.u32 2147483647, %v22
  %v27 = vcombine.high %v23, %v23
  %v29 = vunpack.c.l.s4 1983009808
  %v30 = vunpack.c.0.s8 %v29
  %v31 = vlaneseq
  %v32 = vshrl.u32 %v31, 7
  %v33 = vsub.s32 %v30, %v32
  %v34 = vrot.slane %v23, %v33
  %v36 = vunpack.c.l.s4 1983009808
  %v37 = vunpack.c.0.s8 %v36
  %v38 = vlaneseq
  %v39 = vshrl.u32 %v38, 7
  %v40 = vsub.s32 %v37, %v39
  %v41 = vrot.slane %v27, %v40
  %v42 = vcombine.high %v34, %v34
  %v43 = vcombine.high %v41, %v41
  %v44 = vcombine.high %v24, %v24
  %v46 = vunpack.c.l.s4 1983009808
  %v47 = vunpack.c.0.s8 %v46
  %v48 = vlaneseq
  %v49 = vshrl.u32 %v48, 7
  %v50 = vsub.s32 %v47, %v49
  %v51 = vrot.slane %v24, %v50
  %v53 = vunpack.c.l.s4 1983009808
  %v54 = vunpack.c.0.s8 %v53
  %v55 = vlaneseq
  %v56 = vshrl.u32 %v55, 7
  %v57 = vsub.s32 %v54, %v56
  %v58 = vrot.slane %v44, %v57
  %v59 = vcombine.high %v51, %v51
  %v60 = vcombine.high %v58, %v58
  %vm69 = vcmask 1041408
  %v70 = vsel %vm69, %v34, -inf
  %v71 = vrot.slane %v70, 4
  %v72 = vmax.f32 %v70, %v71
  %v73 = vrot.slane %v72, 2
  %v74 = vmax.f32 %v72, %v73
  %v75 = vrot.slane %v74, 1
  %v76 = vmax.f32 %v74, %v75
  %v77 = vsel %vm69, %v42, -inf
  %v78 = vrot.slane %v77, 4
  %v79 = vmax.f32 %v77, %v78
  %v80 = vrot.slane %v79, 2
  %v81 = vmax.f32 %v79, %v80
  %v82 = vrot.slane %v81, 1
  %v83 = vmax.f32 %v81, %v82
  %v84 = vsel %vm69, %v41, -inf
  %v85 = vrot.slane %v84, 4
  %v86 = vmax.f32 %v84, %v85
  %v87 = vrot.slane %v86, 2
  %v88 = vmax.f32 %v86, %v87
  %v89 = vrot.slane %v88, 1
  %v90 = vmax.f32 %v88, %v89
  %v91 = vsel %vm69, %v43, -inf
  %v92 = vrot.slane %v91, 4
  %v93 = vmax.f32 %v91, %v92
  %v94 = vrot.slane %v93, 2
  %v95 = vmax.f32 %v93, %v94
  %v96 = vrot.slane %v95, 1
  %v97 = vmax.f32 %v95, %v96
  %v98 = vsel %vm69, %v51, -inf
  %v99 = vrot.slane %v98, 4
  %v100 = vmax.f32 %v98, %v99
  %v101 = vrot.slane %v100, 2
  %v102 = vmax.f32 %v100, %v101
  %v103 = vrot.slane %v102, 1
  %v104 = vmax.f32 %v102, %v103
  %v105 = vsel %vm69, %v59, -inf
  %v106 = vrot.slane %v105, 4
  %v107 = vmax.f32 %v105, %v106
  %v108 = vrot.slane %v107, 2
  %v109 = vmax.f32 %v107, %v108
  %v110 = vrot.slane %v109, 1
  %v111 = vmax.f32 %v109, %v110
  %v112 = vsel %vm69, %v58, -inf
  %v113 = vrot.slane %v112, 4
  %v114 = vmax.f32 %v112, %v113
  %v115 = vrot.slane %v114, 2
  %v116 = vmax.f32 %v114, %v115
  %v117 = vrot.slane %v116, 1
  %v118 = vmax.f32 %v116, %v117
  %v119 = vsel %vm69, %v60, -inf
  %v120 = vrot.slane %v119, 4
  %v121 = vmax.f32 %v119, %v120
  %v122 = vrot.slane %v121, 2
  %v123 = vmax.f32 %v121, %v122
  %v124 = vrot.slane %v123, 1
  %v125 = vmax.f32 %v123, %v124
  %v126 = vmul.f32 %v17, %v21
  %v127 = vmul.f32 %v18, %v22
  %v128 = vand.u32 2147483647, %v126
  %v129 = vand.u32 2147483647, %v127
  %v132 = vcombine.high %v128, %v128
  %v134 = vunpack.c.l.s4 1983009808
  %v135 = vunpack.c.0.s8 %v134
  %v136 = vlaneseq
  %v137 = vshrl.u32 %v136, 7
  %v138 = vsub.s32 %v135, %v137
  %v139 = vrot.slane %v128, %v138
  %v141 = vunpack.c.l.s4 1983009808
  %v142 = vunpack.c.0.s8 %v141
  %v143 = vlaneseq
  %v144 = vshrl.u32 %v143, 7
  %v145 = vsub.s32 %v142, %v144
  %v146 = vrot.slane %v132, %v145
  %v147 = vcombine.high %v139, %v139
  %v148 = vcombine.high %v146, %v146
  %v149 = vcombine.high %v129, %v129
  %v151 = vunpack.c.l.s4 1983009808
  %v152 = vunpack.c.0.s8 %v151
  %v153 = vlaneseq
  %v154 = vshrl.u32 %v153, 7
  %v155 = vsub.s32 %v152, %v154
  %v156 = vrot.slane %v129, %v155
  %v158 = vunpack.c.l.s4 1983009808
  %v159 = vunpack.c.0.s8 %v158
  %v160 = vlaneseq
  %v161 = vshrl.u32 %v160, 7
  %v162 = vsub.s32 %v159, %v161
  %v163 = vrot.slane %v149, %v162
  %v164 = vcombine.high %v156, %v156
  %v165 = vcombine.high %v163, %v163
  %v174 = vsel %vm69, %v139, -inf
  %v175 = vrot.slane %v174, 4
  %v176 = vmax.f32 %v174, %v175
  %v177 = vrot.slane %v176, 2
  %v178 = vmax.f32 %v176, %v177
  %v179 = vrot.slane %v178, 1
  %v180 = vmax.f32 %v178, %v179
  %v181 = vsel %vm69, %v147, -inf
  %v182 = vrot.slane %v181, 4
  %v183 = vmax.f32 %v181, %v182
  %v184 = vrot.slane %v183, 2
  %v185 = vmax.f32 %v183, %v184
  %v186 = vrot.slane %v185, 1
  %v187 = vmax.f32 %v185, %v186
  %v188 = vsel %vm69, %v146, -inf
  %v189 = vrot.slane %v188, 4
  %v190 = vmax.f32 %v188, %v189
  %v191 = vrot.slane %v190, 2
  %v192 = vmax.f32 %v190, %v191
  %v193 = vrot.slane %v192, 1
  %v194 = vmax.f32 %v192, %v193
  %v195 = vsel %vm69, %v148, -inf
  %v196 = vrot.slane %v195, 4
  %v197 = vmax.f32 %v195, %v196
  %v198 = vrot.slane %v197, 2
  %v199 = vmax.f32 %v197, %v198
  %v200 = vrot.slane %v199, 1
  %v201 = vmax.f32 %v199, %v200
  %v202 = vsel %vm69, %v156, -inf
  %v203 = vrot.slane %v202, 4
  %v204 = vmax.f32 %v202, %v203
  %v205 = vrot.slane %v204, 2
  %v206 = vmax.f32 %v204, %v205
  %v207 = vrot.slane %v206, 1
  %v208 = vmax.f32 %v206, %v207
  %v209 = vsel %vm69, %v164, -inf
  %v210 = vrot.slane %v209, 4
  %v211 = vmax.f32 %v209, %v210
  %v212 = vrot.slane %v211, 2
  %v213 = vmax.f32 %v211, %v212
  %v214 = vrot.slane %v213, 1
  %v215 = vmax.f32 %v213, %v214
  %v216 = vsel %vm69, %v163, -inf
  %v217 = vrot.slane %v216, 4
  %v218 = vmax.f32 %v216, %v217
  %v219 = vrot.slane %v218, 2
  %v220 = vmax.f32 %v218, %v219
  %v221 = vrot.slane %v220, 1
  %v222 = vmax.f32 %v220, %v221
  %v223 = vsel %vm69, %v165, -inf
  %v224 = vrot.slane %v223, 4
  %v225 = vmax.f32 %v223, %v224
  %v226 = vrot.slane %v225, 2
  %v227 = vmax.f32 %v225, %v226
  %v228 = vrot.slane %v227, 1
  %v229 = vmax.f32 %v227, %v228
  %v230 = vld [vmem:[%s2] sm:$0xff]
  %v231 = vld [vmem:[%s2 + $0x8] sm:$0xff]
  %vm232 = vcmask 1040384
  %v233 = vsel %vm232, %v76, %v180
  %v234 = vsel %vm232, %v83, %v187
  %v235 = vsel %vm232, %v90, %v194
  %v236 = vsel %vm232, %v97, %v201
  %v237 = vsel %vm232, %v104, %v208
  %v238 = vsel %vm232, %v111, %v215
  %v239 = vsel %vm232, %v118, %v222
  %v240 = vsel %vm232, %v125, %v229
  %v249 = vcombine.low %v233, %v234
  %v250 = vcombine.low %v235, %v236
  %v252 = vunpack.c.l.s4 1983009808
  %v253 = vunpack.c.0.s8 %v252
  %v254 = vlaneseq
  %v255 = vshrl.u32 %v254, 7
  %v256 = vsub.s32 %v253, %v255
  %v257 = vrot.slane %v249, %v256
  %v259 = vunpack.c.l.s4 1983009808
  %v260 = vunpack.c.0.s8 %v259
  %v261 = vlaneseq
  %v262 = vshrl.u32 %v261, 7
  %v263 = vsub.s32 %v260, %v262
  %v264 = vrot.slane %v250, %v263
  %v265 = vcombine.low %v257, %v264
  %v266 = vcombine.low %v237, %v238
  %v267 = vcombine.low %v239, %v240
  %v269 = vunpack.c.l.s4 1983009808
  %v270 = vunpack.c.0.s8 %v269
  %v271 = vlaneseq
  %v272 = vshrl.u32 %v271, 7
  %v273 = vsub.s32 %v270, %v272
  %v274 = vrot.slane %v266, %v273
  %v276 = vunpack.c.l.s4 1983009808
  %v277 = vunpack.c.0.s8 %v276
  %v278 = vlaneseq
  %v279 = vshrl.u32 %v278, 7
  %v280 = vsub.s32 %v277, %v279
  %v281 = vrot.slane %v267, %v280
  %v282 = vcombine.low %v274, %v281
  %v285 = vmax.f32 %v230, %v265
  %v286 = vmax.f32 %v231, %v282
  %287 = vst [vmem:[%s2] sm:$0xff] %v285
  %288 = vst [vmem:[%s2 + $0x8] sm:$0xff] %v286
  // Predicated region
  $region14: #{segment_lut_div.2} parent=0 // pred_check
    _
  $region15: #{segment_lut_div.2} parent=0 // pred_check_branch
    %290 = sbr.rel (0) target = $region17
  $region16: #{segment_lut_div.2} parent=0 // pred_region
    _
  $region17: #{segment_lut_div.2} parent=0 // pred_fallthru
    _
  // Predicated region
  $region18: #{segment_lut_div.2} parent=0 // pred_check
    _
  $region19: #{segment_lut_div.2} parent=0 // pred_check_branch
    %292 = sbr.rel (0) target = $region21
  $region20: #{segment_lut_div.2} parent=0 // pred_region
    _
  $region21: #{segment_lut_div.2} parent=0 // pred_fallthru
    _

</llo_original>
